<compile_context>
chip_gen: v5e
topology: v5e:2x2
jax: 0.10.0
libtpu: 0.0.40
codegen_flags: <defaults>
</compile_context>

<pallas_src>
import jax
import jax.numpy as jnp
from jax.experimental import pallas as pl
from jax.experimental.pallas import tpu as pltpu

COMMON_DIM = 128
INPUT_DIMS = {"transaction": 32, "email": 32, "phone": 32, "device": 64}

_MIN_TILE = 256    # smallest bucketed Pallas row tile
_MAX_TILE = 2048   # 2048x128 f32 out tile = 1 MiB (safe on every generation)
_SMALL_N = 256     # below this, pallas_call dispatch overhead dominates -> XLA dot


def _proj_kernel(tid_ref, x_ref, w_ref, b_ref, o_ref):
    # tid_ref: (1,) int32 scalar-prefetch -- only consumed by the index_maps.
    # x_ref: [TM, D_in]  w_ref: [D_IN_PAD, 128]  b_ref: [1, 128]  o_ref: [TM, 128]
    del tid_ref
    d_in = x_ref.shape[1]
    acc = jnp.dot(x_ref[...], w_ref[:d_in, :],           # pre-transposed weight
                  preferred_element_type=jnp.float32)     # MXU, f32 accumulation
    o_ref[...] = (acc + b_ref[...]).astype(o_ref.dtype)   # f32 VPU add, implicit bcast


def _choose_tile(n):
    # Bucketed tiles -> at most 4 distinct block shapes (no per-n Mosaic
    # recompile); >= 2 grid steps whenever n >= 2 * _MIN_TILE so the "parallel"
    # row axis can shard across both TensorCores on v7x.
    return max(_MIN_TILE, min(_MAX_TILE, pl.next_power_of_2(pl.cdiv(n, 2))))


@jax.jit
def _project(tid, x, w_stack, b_stack):
    n, d_in = x.shape
    _, d_in_pad, d_out = w_stack.shape
    tm = _choose_tile(n)
    grid = (pl.cdiv(n, tm),)
    return pl.pallas_call(
        _proj_kernel,
        out_shape=jax.ShapeDtypeStruct((n, d_out), x.dtype),
        grid_spec=pltpu.PrefetchScalarGridSpec(
            num_scalar_prefetch=1,
            grid=grid,
            in_specs=[
                # x: row-tiled, streamed / double-buffered across the grid.
                pl.BlockSpec((tm, d_in), lambda i, tid_ref: (i, 0)),
                # weight: one [64, 128] block picked by the node-type id,
                # VMEM-resident across all row tiles.
                pl.BlockSpec((None, d_in_pad, d_out),
                             lambda i, tid_ref: (tid_ref[0], 0, 0)),
                # bias: [1, 128] block, also resident across the grid.
                pl.BlockSpec((None, 1, d_out),
                             lambda i, tid_ref: (tid_ref[0], 0, 0)),
            ],
            out_specs=pl.BlockSpec((tm, d_out), lambda i, tid_ref: (i, 0)),
        ),
        compiler_params=pltpu.CompilerParams(
            dimension_semantics=("parallel",),   # row tiles are independent
        ),
    )(tid, x, w_stack, b_stack)


@jax.jit
def _project_small(x, w_t, b):
    # XLA fast path for tiny batches: avoids per-type kernel dispatch entirely.
    return jnp.dot(x, w_t, preferred_element_type=jnp.float32).astype(x.dtype) + b


class FeatureProjector:
    """JAX/Pallas equivalent of the PyTorch FeatureProjector module."""

    def __init__(self, input_dims, common_dim, key):
        self.common_dim = common_dim
        self.node_types = tuple(sorted(input_dims))
        nt = len(self.node_types)
        # Sublane-aligned pad of the largest real d_in (64 here, was 128).
        d_in_pad = max(8, -(-max(input_dims.values()) // 8) * 8)

        w_stack = jnp.zeros((nt, d_in_pad, common_dim), jnp.float32)
        b_stack = jnp.zeros((nt, 1, common_dim), jnp.float32)
        self.ref_params = {}
        self._tids = {}
        for i, name in enumerate(self.node_types):
            d_in = input_dims[name]
            k_w, k_b = jax.random.split(jax.random.fold_in(key, i))
            bound = 1.0 / (d_in ** 0.5)  # nn.Linear init: U(-1/sqrt(d_in), 1/sqrt(d_in))
            # Stored pre-transposed: [D_in, D_out] (D_out on lanes).
            w_t = jax.random.uniform(k_w, (d_in, common_dim), jnp.float32, -bound, bound)
            b = jax.random.uniform(k_b, (1, common_dim), jnp.float32, -bound, bound)
            w_stack = w_stack.at[i, :d_in, :].set(w_t)
            b_stack = b_stack.at[i].set(b)
            self.ref_params[name] = (w_t, b)
            self._tids[name] = jnp.array([i], jnp.int32)  # built once, reused per call
        self.w_stack = w_stack
        self.b_stack = b_stack

    def forward(self, node_type, features):
        if features.shape[0] < _SMALL_N:
            w_t, b = self.ref_params[node_type]
            return _project_small(features, w_t, b)
        return _project(self._tids[node_type], features, self.w_stack, self.b_stack)


if __name__ == "__main__":
    key = jax.random.PRNGKey(0)
    proj = FeatureProjector(INPUT_DIMS, COMMON_DIM, jax.random.fold_in(key, 123))

    # Small batches hit the XLA fast path; phone (n=300) exercises the Pallas
    # path with a partial last row tile; device (n=1024) gives a 2-step grid.
    batch_sizes = {"transaction": 8, "email": 8, "phone": 300, "device": 1024}

    ok = True
    for i, node_type in enumerate(sorted(INPUT_DIMS)):
        d_in = INPUT_DIMS[node_type]
        n = batch_sizes[node_type]
        x = jax.random.normal(jax.random.fold_in(key, 1000 + i), (n, d_in),
                              jnp.float32)
        out = jax.block_until_ready(proj.forward(node_type, x))
        assert out.shape == (n, COMMON_DIM), out.shape

        # Reference in plain JAX (highest-precision matmul).
        w_t, b = proj.ref_params[node_type]
        ref = jnp.dot(x, w_t, precision=jax.lax.Precision.HIGHEST) + b
        if not jnp.allclose(out, ref, atol=1e-4, rtol=1e-4):
            ok = False

    if ok:
        print("KERNEL_OK")
</pallas_src>

<mosaic_0001>
module attributes {stable_mosaic.version = 11 : i64} {
  func.func @_proj_kernel(%arg0: i32, %arg1: memref<1xi32, #tpu.memory_space<smem>>, %arg2: memref<512x64xf32, #tpu.memory_space<vmem>>, %arg3: memref<1x64x128xf32, #tpu.memory_space<vmem>>, %arg4: memref<1x1x128xf32, #tpu.memory_space<vmem>>, %arg5: memref<512x128xf32, #tpu.memory_space<vmem>>) attributes {dimension_semantics = [#tpu.dimension_semantics<parallel>], iteration_bounds = array<i64: 2>, scalar_prefetch = 1 : i64, scratch_operands = 0 : i64, tpu.core_type = #tpu.core_type<tc>, window_params = [{transform_indices = @transform_0, window_bounds = array<i64: 512, 64>}, {transform_indices = @transform_1, window_bounds = array<i64: 1, 64, 128>}, {transform_indices = @transform_2, window_bounds = array<i64: 1, 1, 128>}, {transform_indices = @transform_3, window_bounds = array<i64: 512, 128>}]} {
    %c0 = arith.constant 0 : index
    %c0_0 = arith.constant 0 : index
    %0 = vector.load %arg2[%c0, %c0_0] : memref<512x64xf32, #tpu.memory_space<vmem>>, vector<512x64xf32>
    %c0_1 = arith.constant 0 : index
    %c0_2 = arith.constant 0 : index
    %c0_3 = arith.constant 0 : index
    %1 = vector.load %arg3[%c0_1, %c0_2, %c0_3] : memref<1x64x128xf32, #tpu.memory_space<vmem>>, vector<1x64x128xf32>
    %2 = vector.shape_cast %1 : vector<1x64x128xf32> to vector<64x128xf32>
    %cst = arith.constant dense<0.000000e+00> : vector<512x128xf32>
    %3 = tpu.matmul %0, %2, %cst {dimension_numbers = #tpu.dot_dimension_numbers<[1], [0], [0], [1], [0, 0, 1, 1], [], []>} : vector<512x64xf32>, vector<64x128xf32>, vector<512x128xf32> -> vector<512x128xf32>
    %c0_4 = arith.constant 0 : index
    %c0_5 = arith.constant 0 : index
    %c0_6 = arith.constant 0 : index
    %4 = vector.load %arg4[%c0_4, %c0_5, %c0_6] : memref<1x1x128xf32, #tpu.memory_space<vmem>>, vector<1x1x128xf32>
    %5 = vector.shape_cast %4 : vector<1x1x128xf32> to vector<1x128xf32>
    %6 = vector.broadcast %5 : vector<1x128xf32> to vector<512x128xf32>
    %7 = arith.addf %3, %6 : vector<512x128xf32>
    %c0_7 = arith.constant 0 : index
    %c0_8 = arith.constant 0 : index
    %8 = vector.load %arg5[%c0_7, %c0_8] : memref<512x128xf32, #tpu.memory_space<vmem>>, vector<512x128xf32>
    tpu.vector_store %arg5[%c0_7, %c0_8], %7 {strides = array<i32>} : memref<512x128xf32, #tpu.memory_space<vmem>>, vector<512x128xf32>,
    return
  }
  func.func @transform_0(%arg0: i32, %arg1: memref<1xi32, #tpu.memory_space<smem>>) -> (i32, i32) {
    %c0_i32 = arith.constant 0 : i32
    %c0_i32_0 = arith.constant 0 : i32
    return %arg0, %c0_i32 : i32, i32
  }
  func.func @transform_1(%arg0: i32, %arg1: memref<1xi32, #tpu.memory_space<smem>>) -> (i32, i32, i32) {
    %c0 = arith.constant 0 : index
    %0 = memref.load %arg1[%c0] : memref<1xi32, #tpu.memory_space<smem>>
    %c0_i32 = arith.constant 0 : i32
    %c0_i32_0 = arith.constant 0 : i32
    %c0_i32_1 = arith.constant 0 : i32
    return %0, %c0_i32, %c0_i32_0 : i32, i32, i32
  }
  func.func @transform_2(%arg0: i32, %arg1: memref<1xi32, #tpu.memory_space<smem>>) -> (i32, i32, i32) {
    %c0 = arith.constant 0 : index
    %0 = memref.load %arg1[%c0] : memref<1xi32, #tpu.memory_space<smem>>
    %c0_i32 = arith.constant 0 : i32
    %c0_i32_0 = arith.constant 0 : i32
    %c0_i32_1 = arith.constant 0 : i32
    return %0, %c0_i32, %c0_i32_0 : i32, i32, i32
  }
  func.func @transform_3(%arg0: i32, %arg1: memref<1xi32, #tpu.memory_space<smem>>) -> (i32, i32) {
    %c0_i32 = arith.constant 0 : i32
    %c0_i32_0 = arith.constant 0 : i32
    return %arg0, %c0_i32 : i32, i32
  }
}

</mosaic_0001>

<llo_original>
// kernel: _project.1
$region0: #{_project.1}
  #allocation0 [shape = 'u32[]', space=smem, size = 0x4, offset = 0x4, fixed_abs, tag = 'smem constant byte address 0x4 - core index']
  #allocation1 [shape = 'u32[72,128]{1,0:T(1,128)}', space=vmem, size = 0x9000, scoped, tag = 'internal scratch']
  #allocation2 [shape = 's32[1]{0}', space=sflag, size = 0x4, scoped, tag = 'scoped memory for _project.1']
  #allocation3 [shape = 's32[1]{0:T(128)S(6)}', space=smem, size = 0x200, scoped, tag = 'prefetched SMEM operand 0']
  %s0 = inlined_call_operand.<no memory space> [shape: s32[1], index: 0, kind: input, shape index: {}]
  %s1 = inlined_call_operand.vmem [shape: f32[1024,64], index: 1, kind: input, shape index: {}]
  %s2 = inlined_call_operand.vmem [shape: f32[4,64,128], index: 2, kind: input, shape index: {}]
  %s3 = inlined_call_operand.vmem [shape: f32[4,1,128], index: 3, kind: input, shape index: {}]
  %s4 = inlined_call_operand.hbm [shape: f32[1024,128], index: 4, kind: output, shape index: {}]
  %s5 = sld [smem:[#allocation0]]
  $region45: #{_project.1} parent=0
    _
  %s7 = ssub.s32 1, %s5
  %s8 = scalar_select 0, %s7, %s5
  %9 = sst [smem:[#allocation3]] %s0
  $region1: #{_project.1} parent=0
    #allocation4 [shape = 'u8[524288]{0}', space=vmem, size = 0x80000, scoped, tag = 'output window, operand 0']
    #allocation5 [shape = 's32[2]{0}', space=sflag, size = 0x8, scoped, tag = 'scoped memory for _project.1']
    %10 = vsyncpa [#allocation5], 0
    %s11 = scalar_lea.sflag [#allocation5], 1
    %12 = vsyncpa %s11, 0
    loop: start=0, step=1, limit=4
    $region2: #{_project.1} parent=1 // loop_pre_header
      _
    $region3: #{_project.1} parent=1 // loop_header
      %s14 = sphi 0, %s18
      %p15 = scmp.ge.s32.totalorder %s14, 4
      %s24 = sphi 0, %s26
      %s27 = sphi 0, %s24
      %s28 = sphi 0, %s27
      %s44 = sphi 0, %s28
      %s52 = sphi 0, %s54
      %s55 = sphi 0, %s52
      %s56 = sphi 0, %s55
      %s72 = sphi 0, %s56
      %s80 = sphi 0, %s82
      %s83 = sphi 0, %s80
      %s84 = sphi 0, %s83
      %s100 = sphi 0, %s84
      %s106 = sphi 0, %s108
      %s109 = sphi 0, %s106
      %s110 = sphi 0, %s109
      %s126 = sphi 0, %s110
    $region4: #{_project.1} parent=1 // loop_header_branch
      %17 = sbr.rel (%p15) target = $region8
    $region5: #{_project.1} parent=1 // loop_body
      %s19 = ssub.s32 %s14, 1
      %s20 = ssub.s32 %s14, 2
      %s21 = sadd.s32 %s14, 1
      %s22 = ssub.s32 %s14, %s21
      %p23 = scmp.eq.s32.totalorder %s22, 0
      %s25 = sadd.s32 %s24, 1
      %s26 = scalar_select %p23, %s24, %s25
      %p29 = pneg %p23
      %p30 = scmp.eq.s32.totalorder %s14, 1
      %p31 = por %p29, %p30
      %p32 = scmp.ne.s32.totalorder %s24, %s27
      %p33 = scmp.eq.s32.totalorder %s14, 0
      %p34 = por %p32, %p33
      %p35 = scmp.ne.s32.totalorder %s24, %s27
      %p36 = scmp.eq.s32.totalorder %s19, 1
      %p37 = por %p35, %p36
      %p38 = scmp.ne.s32.totalorder %s27, %s28
      %p39 = scmp.eq.s32.totalorder %s19, 0
      %p40 = por %p38, %p39
      %p41 = scmp.ne.s32.totalorder %s27, %s28
      %p42 = scmp.eq.s32.totalorder %s20, 1
      %p43 = por %p41, %p42
      %p45 = scmp.ne.s32.totalorder %s28, %s44
      %p46 = scmp.eq.s32.totalorder %s20, 0
      %p47 = por %p45, %p46
      %s48 = sld [smem:[#allocation3]]
      %s49 = sld [smem:[#allocation3]]
      %s50 = ssub.s32 %s48, %s49
      %p51 = scmp.eq.s32.totalorder %s50, 0
      %s53 = sadd.s32 %s52, 1
      %s54 = scalar_select %p51, %s52, %s53
      %p57 = pneg %p51
      %p58 = scmp.eq.s32.totalorder %s14, 1
      %p59 = por %p57, %p58
      %p60 = scmp.ne.s32.totalorder %s52, %s55
      %p61 = scmp.eq.s32.totalorder %s14, 0
      %p62 = por %p60, %p61
      %p63 = scmp.ne.s32.totalorder %s52, %s55
      %p64 = scmp.eq.s32.totalorder %s19, 1
      %p65 = por %p63, %p64
      %p66 = scmp.ne.s32.totalorder %s55, %s56
      %p67 = scmp.eq.s32.totalorder %s19, 0
      %p68 = por %p66, %p67
      %p69 = scmp.ne.s32.totalorder %s55, %s56
      %p70 = scmp.eq.s32.totalorder %s20, 1
      %p71 = por %p69, %p70
      %p73 = scmp.ne.s32.totalorder %s56, %s72
      %p74 = scmp.eq.s32.totalorder %s20, 0
      %p75 = por %p73, %p74
      %s76 = sld [smem:[#allocation3]]
      %s77 = sld [smem:[#allocation3]]
      %s78 = ssub.s32 %s76, %s77
      %p79 = scmp.eq.s32.totalorder %s78, 0
      %s81 = sadd.s32 %s80, 1
      %s82 = scalar_select %p79, %s80, %s81
      %p85 = pneg %p79
      %p86 = scmp.eq.s32.totalorder %s14, 1
      %p87 = por %p85, %p86
      %p88 = scmp.ne.s32.totalorder %s80, %s83
      %p89 = scmp.eq.s32.totalorder %s14, 0
      %p90 = por %p88, %p89
      %p91 = scmp.ne.s32.totalorder %s80, %s83
      %p92 = scmp.eq.s32.totalorder %s19, 1
      %p93 = por %p91, %p92
      %p94 = scmp.ne.s32.totalorder %s83, %s84
      %p95 = scmp.eq.s32.totalorder %s19, 0
      %p96 = por %p94, %p95
      %p97 = scmp.ne.s32.totalorder %s83, %s84
      %p98 = scmp.eq.s32.totalorder %s20, 1
      %p99 = por %p97, %p98
      %p101 = scmp.ne.s32.totalorder %s84, %s100
      %p102 = scmp.eq.s32.totalorder %s20, 0
      %p103 = por %p101, %p102
      %s104 = ssub.s32 %s14, %s21
      %p105 = scmp.eq.s32.totalorder %s104, 0
      %s107 = sadd.s32 %s106, 1
      %s108 = scalar_select %p105, %s106, %s107
      %p111 = pneg %p105
      %p112 = scmp.eq.s32.totalorder %s14, 1
      %p113 = por %p111, %p112
      %p114 = scmp.ne.s32.totalorder %s106, %s109
      %p115 = scmp.eq.s32.totalorder %s14, 0
      %p116 = por %p114, %p115
      %p117 = scmp.ne.s32.totalorder %s106, %s109
      %p118 = scmp.eq.s32.totalorder %s19, 1
      %p119 = por %p117, %p118
      %p120 = scmp.ne.s32.totalorder %s109, %s110
      %p121 = scmp.eq.s32.totalorder %s19, 0
      %p122 = por %p120, %p121
      %p123 = scmp.ne.s32.totalorder %s109, %s110
      %p124 = scmp.eq.s32.totalorder %s20, 1
      %p125 = por %p123, %p124
      %p127 = scmp.ne.s32.totalorder %s110, %s126
      %p128 = scmp.eq.s32.totalorder %s20, 0
      %p129 = por %p127, %p128
      %p130 = scmp.le.s32.totalorder 1, %s14
      %p131 = scmp.lt.s32.totalorder %s14, 3
      %p132 = pnand %p130, %p131
      %p133 = pneg %p132
      // Predicated region
      $region9: #{_project.1} parent=5 // pred_check
        _
      $region10: #{_project.1} parent=5 // pred_check_branch
        %135 = sbr.rel (%p132) target = $region12
      $region11: #{_project.1} parent=5 // pred_region
        %s136 = ssub.s32 %s14, 1
        // Predicated region
        $region13: #{_project.1} parent=11 // pred_check
          %p137 = pneg %p68
        $region14: #{_project.1} parent=11 // pred_check_branch
          %139 = sbr.rel (%p137) target = $region16
        $region15: #{_project.1} parent=11 // pred_region
          %s140 = sld [smem:[#allocation3]]
          %p141 = scmp.lt.s32.totalorder %s140, 3
          %s142 = scalar_select %p141, %s140, 3
          %s143 = smul.addr %s142, 8
          %s144 = smul.addr %s143, 8
          %s145 = scalar_lea.vmem %s2, %s144
          %s146 = sld [smem:[#allocation3]]
        $region16: #{_project.1} parent=11 // pred_fallthru
          _
        // Predicated region
        $region17: #{_project.1} parent=11 // pred_check
          %p147 = pneg %p96
        $region18: #{_project.1} parent=11 // pred_check_branch
          %149 = sbr.rel (%p147) target = $region20
        $region19: #{_project.1} parent=11 // pred_region
          %s150 = sld [smem:[#allocation3]]
          %p151 = scmp.lt.s32.totalorder %s150, 3
          %s152 = scalar_select %p151, %s150, 3
          %s153 = scalar_lea.vmem %s3, %s152
          %s154 = sld [smem:[#allocation3]]
        $region20: #{_project.1} parent=11 // pred_fallthru
          _
      $region12: #{_project.1} parent=5 // pred_fallthru
        _
      %p155 = scmp.lt.s32.totalorder %s14, 2
      // Predicated region
      $region21: #{_project.1} parent=5 // pred_check
        %p156 = pneg %p155
      $region22: #{_project.1} parent=5 // pred_check_branch
        %158 = sbr.rel (%p156) target = $region24
      $region23: #{_project.1} parent=5 // pred_region
        // Predicated region
        $region25: #{_project.1} parent=23 // pred_check
          %p159 = pneg %p34
        $region26: #{_project.1} parent=23 // pred_check_branch
          %161 = sbr.rel (%p159) target = $region28
        $region27: #{_project.1} parent=23 // pred_region
          %s162 = smul.u32 64, %s14
          %p163 = scmp.lt.s32.totalorder %s162, 127
          %s164 = scalar_select %p163, %s162, 127
          %s165 = smul.addr %s164, 8
          %s166 = scalar_lea.vmem %s1, %s165
          %s167 = smul.u32 64, %s14
        $region28: #{_project.1} parent=23 // pred_fallthru
          _
      $region24: #{_project.1} parent=5 // pred_fallthru
        _
      %p168 = scmp.le.s32.totalorder 1, %s14
      %p169 = scmp.lt.s32.totalorder %s14, 3
      %p170 = pnand %p168, %p169
      %p171 = pneg %p170
      // Predicated region
      $region29: #{_project.1} parent=5 // pred_check
        _
      $region30: #{_project.1} parent=5 // pred_check_branch
        %173 = sbr.rel (%p170) target = $region32
      $region31: #{_project.1} parent=5 // pred_region
        %s174 = ssub.s32 %s14, 1
        %s175 = smul.u32 64, %s19
        %p176 = scmp.lt.s32.totalorder %s175, 127
        %s177 = scalar_select %p176, %s175, 127
        %s178 = smul.addr %s177, 8
        %s179 = scalar_lea.vmem %s1, %s178
        %p180 = pneg %p40
        %p181 = pneg %p37
        %s182 = sld [smem:[#allocation3]]
        %p183 = scmp.lt.s32.totalorder %s182, 3
        %s184 = scalar_select %p183, %s182, 3
        %s185 = smul.addr %s184, 8
        %s186 = smul.addr %s185, 8
        %s187 = scalar_lea.vmem %s2, %s186
        %p188 = pneg %p68
        %p189 = pneg %p65
        %s190 = sld [smem:[#allocation3]]
        %p191 = scmp.lt.s32.totalorder %s190, 3
        %s192 = scalar_select %p191, %s190, 3
        %s193 = scalar_lea.vmem %s3, %s192
        %p194 = pneg %p96
        %p195 = pneg %p93
        %p196 = pneg %p122
        %p197 = pneg %p119
        %s198 = sand.u32 %s109, 1
        %s199 = scalar_lea.sflag [#allocation5], %s198
        %s200 = sand.u32 %s109, 1
        %s201 = smul.addr %s200, 512
        %s202 = scalar_lea.vmem [#allocation4], %s201
        %s203 = smul.u32 64, %s19
        %p204 = scmp.lt.s32.totalorder %s203, 127
        %s205 = scalar_select %p204, %s203, 127
        %s206 = smul.addr %s205, 8
        %s207 = scalar_lea.vmem %s1, %s206
        %s208 = smul.u32 64, %s19
        %s209 = sld [smem:[#allocation3]]
        %p210 = scmp.lt.s32.totalorder %s209, 3
        %s211 = scalar_select %p210, %s209, 3
        %s212 = smul.addr %s211, 8
        %s213 = smul.addr %s212, 8
        %s214 = scalar_lea.vmem %s2, %s213
        %s215 = sld [smem:[#allocation3]]
        %s216 = sld [smem:[#allocation3]]
        %p217 = scmp.lt.s32.totalorder %s216, 3
        %s218 = scalar_select %p217, %s216, 3
        %s219 = scalar_lea.vmem %s3, %s218
        %s220 = sld [smem:[#allocation3]]
        %s221 = smul.u32 64, %s19
        %v222 = vld [vmem:[%s207] sm:$0xff]
        %v223 = vld [vmem:[%s207 + $0x8] sm:$0xff]
        %v224 = vld [vmem:[%s207 + $0x10] sm:$0xff]
        %v225 = vld [vmem:[%s207 + $0x18] sm:$0xff]
        %v226 = vld [vmem:[%s207 + $0x20] sm:$0xff]
        %v227 = vld [vmem:[%s207 + $0x28] sm:$0xff]
        %v228 = vld [vmem:[%s207 + $0x30] sm:$0xff]
        %v229 = vld [vmem:[%s207 + $0x38] sm:$0xff]
        %v230 = vld [vmem:[%s207 + $0x40] sm:$0xff]
        %v231 = vld [vmem:[%s207 + $0x48] sm:$0xff]
        %v232 = vld [vmem:[%s207 + $0x50] sm:$0xff]
        %v233 = vld [vmem:[%s207 + $0x58] sm:$0xff]
        %v234 = vld [vmem:[%s207 + $0x60] sm:$0xff]
        %v235 = vld [vmem:[%s207 + $0x68] sm:$0xff]
        %v236 = vld [vmem:[%s207 + $0x70] sm:$0xff]
        %v237 = vld [vmem:[%s207 + $0x78] sm:$0xff]
        %v238 = vld [vmem:[%s207 + $0x80] sm:$0xff]
        %v239 = vld [vmem:[%s207 + $0x88] sm:$0xff]
        %v240 = vld [vmem:[%s207 + $0x90] sm:$0xff]
        %v241 = vld [vmem:[%s207 + $0x98] sm:$0xff]
        %v242 = vld [vmem:[%s207 + $0xa0] sm:$0xff]
        %v243 = vld [vmem:[%s207 + $0xa8] sm:$0xff]
        %v244 = vld [vmem:[%s207 + $0xb0] sm:$0xff]
        %v245 = vld [vmem:[%s207 + $0xb8] sm:$0xff]
        %v246 = vld [vmem:[%s207 + $0xc0] sm:$0xff]
        %v247 = vld [vmem:[%s207 + $0xc8] sm:$0xff]
        %v248 = vld [vmem:[%s207 + $0xd0] sm:$0xff]
        %v249 = vld [vmem:[%s207 + $0xd8] sm:$0xff]
        %v250 = vld [vmem:[%s207 + $0xe0] sm:$0xff]
        %v251 = vld [vmem:[%s207 + $0xe8] sm:$0xff]
        %v252 = vld [vmem:[%s207 + $0xf0] sm:$0xff]
        %v253 = vld [vmem:[%s207 + $0xf8] sm:$0xff]
        %v254 = vld [vmem:[%s207 + $0x100] sm:$0xff]
        %v255 = vld [vmem:[%s207 + $0x108] sm:$0xff]
        %v256 = vld [vmem:[%s207 + $0x110] sm:$0xff]
        %v257 = vld [vmem:[%s207 + $0x118] sm:$0xff]
        %v258 = vld [vmem:[%s207 + $0x120] sm:$0xff]
        %v259 = vld [vmem:[%s207 + $0x128] sm:$0xff]
        %v260 = vld [vmem:[%s207 + $0x130] sm:$0xff]
        %v261 = vld [vmem:[%s207 + $0x138] sm:$0xff]
        %v262 = vld [vmem:[%s207 + $0x140] sm:$0xff]
        %v263 = vld [vmem:[%s207 + $0x148] sm:$0xff]
        %v264 = vld [vmem:[%s207 + $0x150] sm:$0xff]
        %v265 = vld [vmem:[%s207 + $0x158] sm:$0xff]
        %v266 = vld [vmem:[%s207 + $0x160] sm:$0xff]
        %v267 = vld [vmem:[%s207 + $0x168] sm:$0xff]
        %v268 = vld [vmem:[%s207 + $0x170] sm:$0xff]
        %v269 = vld [vmem:[%s207 + $0x178] sm:$0xff]
        %v270 = vld [vmem:[%s207 + $0x180] sm:$0xff]
        %v271 = vld [vmem:[%s207 + $0x188] sm:$0xff]
        %v272 = vld [vmem:[%s207 + $0x190] sm:$0xff]
        %v273 = vld [vmem:[%s207 + $0x198] sm:$0xff]
        %v274 = vld [vmem:[%s207 + $0x1a0] sm:$0xff]
        %v275 = vld [vmem:[%s207 + $0x1a8] sm:$0xff]
        %v276 = vld [vmem:[%s207 + $0x1b0] sm:$0xff]
        %v277 = vld [vmem:[%s207 + $0x1b8] sm:$0xff]
        %v278 = vld [vmem:[%s207 + $0x1c0] sm:$0xff]
        %v279 = vld [vmem:[%s207 + $0x1c8] sm:$0xff]
        %v280 = vld [vmem:[%s207 + $0x1d0] sm:$0xff]
        %v281 = vld [vmem:[%s207 + $0x1d8] sm:$0xff]
        %v282 = vld [vmem:[%s207 + $0x1e0] sm:$0xff]
        %v283 = vld [vmem:[%s207 + $0x1e8] sm:$0xff]
        %v284 = vld [vmem:[%s207 + $0x1f0] sm:$0xff]
        %v285 = vld [vmem:[%s207 + $0x1f8] sm:$0xff]
        %v286 = vld [vmem:[%s214] sm:$0xff]
        %v287 = vld [vmem:[%s214 + $0x8] sm:$0xff]
        %v288 = vld [vmem:[%s214 + $0x10] sm:$0xff]
        %v289 = vld [vmem:[%s214 + $0x18] sm:$0xff]
        %v290 = vld [vmem:[%s214 + $0x20] sm:$0xff]
        %v291 = vld [vmem:[%s214 + $0x28] sm:$0xff]
        %v292 = vld [vmem:[%s214 + $0x30] sm:$0xff]
        %v293 = vld [vmem:[%s214 + $0x38] sm:$0xff]
        %v294 = vld [vmem:[%s219] sm:$0x1]
        %v296 = vperm.slane %v294, 0
        %vm298 = vcmask 523264
        %v300 = vsel %vm298, %v222, 0
        %v303 = vsel %vm298, %v223, 0
        %v306 = vsel %vm298, %v224, 0
        %v309 = vsel %vm298, %v225, 0
        %v312 = vsel %vm298, %v226, 0
        %v315 = vsel %vm298, %v227, 0
        %v318 = vsel %vm298, %v228, 0
        %v321 = vsel %vm298, %v229, 0
        %v324 = vsel %vm298, %v230, 0
        %v327 = vsel %vm298, %v231, 0
        %v330 = vsel %vm298, %v232, 0
        %v333 = vsel %vm298, %v233, 0
        %v336 = vsel %vm298, %v234, 0
        %v339 = vsel %vm298, %v235, 0
        %v342 = vsel %vm298, %v236, 0
        %v345 = vsel %vm298, %v237, 0
        %v348 = vsel %vm298, %v238, 0
        %v351 = vsel %vm298, %v239, 0
        %v354 = vsel %vm298, %v240, 0
        %v357 = vsel %vm298, %v241, 0
        %v360 = vsel %vm298, %v242, 0
        %v363 = vsel %vm298, %v243, 0
        %v366 = vsel %vm298, %v244, 0
        %v369 = vsel %vm298, %v245, 0
        %v372 = vsel %vm298, %v246, 0
        %v375 = vsel %vm298, %v247, 0
        %v378 = vsel %vm298, %v248, 0
        %v381 = vsel %vm298, %v249, 0
        %v384 = vsel %vm298, %v250, 0
        %v387 = vsel %vm298, %v251, 0
        %v390 = vsel %vm298, %v252, 0
        %v393 = vsel %vm298, %v253, 0
        %v396 = vsel %vm298, %v254, 0
        %v399 = vsel %vm298, %v255, 0
        %v402 = vsel %vm298, %v256, 0
        %v405 = vsel %vm298, %v257, 0
        %v408 = vsel %vm298, %v258, 0
        %v411 = vsel %vm298, %v259, 0
        %v414 = vsel %vm298, %v260, 0
        %v417 = vsel %vm298, %v261, 0
        %v420 = vsel %vm298, %v262, 0
        %v423 = vsel %vm298, %v263, 0
        %v426 = vsel %vm298, %v264, 0
        %v429 = vsel %vm298, %v265, 0
        %v432 = vsel %vm298, %v266, 0
        %v435 = vsel %vm298, %v267, 0
        %v438 = vsel %vm298, %v268, 0
        %v441 = vsel %vm298, %v269, 0
        %v444 = vsel %vm298, %v270, 0
        %v447 = vsel %vm298, %v271, 0
        %v450 = vsel %vm298, %v272, 0
        %v453 = vsel %vm298, %v273, 0
        %v456 = vsel %vm298, %v274, 0
        %v459 = vsel %vm298, %v275, 0
        %v462 = vsel %vm298, %v276, 0
        %v465 = vsel %vm298, %v277, 0
        %v468 = vsel %vm298, %v278, 0
        %v471 = vsel %vm298, %v279, 0
        %v474 = vsel %vm298, %v280, 0
        %v477 = vsel %vm298, %v281, 0
        %v480 = vsel %vm298, %v282, 0
        %v483 = vsel %vm298, %v283, 0
        %v486 = vsel %vm298, %v284, 0
        %v489 = vsel %vm298, %v285, 0
        %491 = vmatpush.msra.mxu0 0.0
        %492 = vmatpush.msra.mxu0 0.0
        %493 = vmatpush.msra.mxu0 0.0
        %494 = vmatpush.msra.mxu0 0.0
        %495 = vmatpush.msra.mxu0 0.0
        %496 = vmatpush.msra.mxu0 0.0
        %497 = vmatpush.msra.mxu0 0.0
        %498 = vmatpush.msra.mxu0 0.0
        %499 = vmatpush.msra.mxu0 %v293
        %500 = vmatpush.msra.mxu0 %v292
        %501 = vmatpush.msra.mxu0 %v291
        %502 = vmatpush.msra.mxu0 %v290
        %503 = vmatpush.msra.mxu0 %v289
        %504 = vmatpush.msra.mxu0 %v288
        %505 = vmatpush.msra.mxu0 %v287
        %506 = vmatpush.msra.mxu0 %v286
        %507 = vmatmul.f32.gmra.mxu0 %v300
        %v508 = vpop.f32.mrf.mxu0
        %v509 = vadd.f32 %v296, %v508
        %510 = vmatmul.f32.gmra.mxu0 %v303
        %v511 = vpop.f32.mrf.mxu0
        %v512 = vadd.f32 %v296, %v511
        %513 = vmatmul.f32.gmra.mxu0 %v306
        %v514 = vpop.f32.mrf.mxu0
        %v515 = vadd.f32 %v296, %v514
        %516 = vmatmul.f32.gmra.mxu0 %v309
        %v517 = vpop.f32.mrf.mxu0
        %v518 = vadd.f32 %v296, %v517
        %519 = vmatmul.f32.gmra.mxu0 %v312
        %v520 = vpop.f32.mrf.mxu0
        %v521 = vadd.f32 %v296, %v520
        %522 = vmatmul.f32.gmra.mxu0 %v315
        %v523 = vpop.f32.mrf.mxu0
        %v524 = vadd.f32 %v296, %v523
        %525 = vmatmul.f32.gmra.mxu0 %v318
        %v526 = vpop.f32.mrf.mxu0
        %v527 = vadd.f32 %v296, %v526
        %528 = vmatmul.f32.gmra.mxu0 %v321
        %v529 = vpop.f32.mrf.mxu0
        %v530 = vadd.f32 %v296, %v529
        %531 = vmatmul.f32.gmra.mxu0 %v324
        %v532 = vpop.f32.mrf.mxu0
        %v533 = vadd.f32 %v296, %v532
        %534 = vmatmul.f32.gmra.mxu0 %v327
        %v535 = vpop.f32.mrf.mxu0
        %v536 = vadd.f32 %v296, %v535
        %537 = vmatmul.f32.gmra.mxu0 %v330
        %v538 = vpop.f32.mrf.mxu0
        %v539 = vadd.f32 %v296, %v538
        %540 = vmatmul.f32.gmra.mxu0 %v333
        %v541 = vpop.f32.mrf.mxu0
        %v542 = vadd.f32 %v296, %v541
        %543 = vmatmul.f32.gmra.mxu0 %v336
        %v544 = vpop.f32.mrf.mxu0
        %v545 = vadd.f32 %v296, %v544
        %546 = vmatmul.f32.gmra.mxu0 %v339
        %v547 = vpop.f32.mrf.mxu0
        %v548 = vadd.f32 %v296, %v547
        %549 = vmatmul.f32.gmra.mxu0 %v342
        %v550 = vpop.f32.mrf.mxu0
        %v551 = vadd.f32 %v296, %v550
        %552 = vmatmul.f32.gmra.mxu0 %v345
        %v553 = vpop.f32.mrf.mxu0
        %v554 = vadd.f32 %v296, %v553
        %555 = vmatmul.f32.gmra.mxu0 %v348
        %v556 = vpop.f32.mrf.mxu0
        %v557 = vadd.f32 %v296, %v556
        %558 = vmatmul.f32.gmra.mxu0 %v351
        %v559 = vpop.f32.mrf.mxu0
        %v560 = vadd.f32 %v296, %v559
        %561 = vmatmul.f32.gmra.mxu0 %v354
        %v562 = vpop.f32.mrf.mxu0
        %v563 = vadd.f32 %v296, %v562
        %564 = vmatmul.f32.gmra.mxu0 %v357
        %v565 = vpop.f32.mrf.mxu0
        %v566 = vadd.f32 %v296, %v565
        %567 = vmatmul.f32.gmra.mxu0 %v360
        %v568 = vpop.f32.mrf.mxu0
        %v569 = vadd.f32 %v296, %v568
        %570 = vmatmul.f32.gmra.mxu0 %v363
        %v571 = vpop.f32.mrf.mxu0
        %v572 = vadd.f32 %v296, %v571
        %573 = vmatmul.f32.gmra.mxu0 %v366
        %v574 = vpop.f32.mrf.mxu0
        %v575 = vadd.f32 %v296, %v574
        %576 = vmatmul.f32.gmra.mxu0 %v369
        %v577 = vpop.f32.mrf.mxu0
        %v578 = vadd.f32 %v296, %v577
        %579 = vmatmul.f32.gmra.mxu0 %v372
        %v580 = vpop.f32.mrf.mxu0
        %v581 = vadd.f32 %v296, %v580
        %582 = vmatmul.f32.gmra.mxu0 %v375
        %v583 = vpop.f32.mrf.mxu0
        %v584 = vadd.f32 %v296, %v583
        %585 = vmatmul.f32.gmra.mxu0 %v378
        %v586 = vpop.f32.mrf.mxu0
        %v587 = vadd.f32 %v296, %v586
        %588 = vmatmul.f32.gmra.mxu0 %v381
        %v589 = vpop.f32.mrf.mxu0
        %v590 = vadd.f32 %v296, %v589
        %591 = vmatmul.f32.gmra.mxu0 %v384
        %v592 = vpop.f32.mrf.mxu0
        %v593 = vadd.f32 %v296, %v592
        %594 = vmatmul.f32.gmra.mxu0 %v387
        %v595 = vpop.f32.mrf.mxu0
        %v596 = vadd.f32 %v296, %v595
        %597 = vmatmul.f32.gmra.mxu0 %v390
        %v598 = vpop.f32.mrf.mxu0
        %v599 = vadd.f32 %v296, %v598
        %600 = vmatmul.f32.gmra.mxu0 %v393
        %v601 = vpop.f32.mrf.mxu0
        %v602 = vadd.f32 %v296, %v601
        %603 = vmatmul.f32.gmra.mxu0 %v396
        %v604 = vpop.f32.mrf.mxu0
        %v605 = vadd.f32 %v296, %v604
        %606 = vmatmul.f32.gmra.mxu0 %v399
        %v607 = vpop.f32.mrf.mxu0
        %v608 = vadd.f32 %v296, %v607
        %609 = vmatmul.f32.gmra.mxu0 %v402
        %v610 = vpop.f32.mrf.mxu0
        %v611 = vadd.f32 %v296, %v610
        %612 = vmatmul.f32.gmra.mxu0 %v405
        %v613 = vpop.f32.mrf.mxu0
        %v614 = vadd.f32 %v296, %v613
        %615 = vmatmul.f32.gmra.mxu0 %v408
        %v616 = vpop.f32.mrf.mxu0
        %v617 = vadd.f32 %v296, %v616
        %618 = vmatmul.f32.gmra.mxu0 %v411
        %v619 = vpop.f32.mrf.mxu0
        %v620 = vadd.f32 %v296, %v619
        %621 = vmatmul.f32.gmra.mxu0 %v414
        %v622 = vpop.f32.mrf.mxu0
        %v623 = vadd.f32 %v296, %v622
        %624 = vmatmul.f32.gmra.mxu0 %v417
        %v625 = vpop.f32.mrf.mxu0
        %v626 = vadd.f32 %v296, %v625
        %627 = vmatmul.f32.gmra.mxu0 %v420
        %v628 = vpop.f32.mrf.mxu0
        %v629 = vadd.f32 %v296, %v628
        %630 = vmatmul.f32.gmra.mxu0 %v423
        %v631 = vpop.f32.mrf.mxu0
        %v632 = vadd.f32 %v296, %v631
        %633 = vmatmul.f32.gmra.mxu0 %v426
        %v634 = vpop.f32.mrf.mxu0
        %v635 = vadd.f32 %v296, %v634
        %636 = vmatmul.f32.gmra.mxu0 %v429
        %v637 = vpop.f32.mrf.mxu0
        %v638 = vadd.f32 %v296, %v637
        %639 = vmatmul.f32.gmra.mxu0 %v432
        %v640 = vpop.f32.mrf.mxu0
        %v641 = vadd.f32 %v296, %v640
        %642 = vmatmul.f32.gmra.mxu0 %v435
        %v643 = vpop.f32.mrf.mxu0
        %v644 = vadd.f32 %v296, %v643
        %645 = vmatmul.f32.gmra.mxu0 %v438
        %v646 = vpop.f32.mrf.mxu0
        %v647 = vadd.f32 %v296, %v646
        %648 = vmatmul.f32.gmra.mxu0 %v441
        %v649 = vpop.f32.mrf.mxu0
        %v650 = vadd.f32 %v296, %v649
        %651 = vmatmul.f32.gmra.mxu0 %v444
        %v652 = vpop.f32.mrf.mxu0
        %v653 = vadd.f32 %v296, %v652
        %654 = vmatmul.f32.gmra.mxu0 %v447
        %v655 = vpop.f32.mrf.mxu0
        %v656 = vadd.f32 %v296, %v655
        %657 = vmatmul.f32.gmra.mxu0 %v450
        %v658 = vpop.f32.mrf.mxu0
        %v659 = vadd.f32 %v296, %v658
        %660 = vmatmul.f32.gmra.mxu0 %v453
        %v661 = vpop.f32.mrf.mxu0
        %v662 = vadd.f32 %v296, %v661
        %663 = vmatmul.f32.gmra.mxu0 %v456
        %v664 = vpop.f32.mrf.mxu0
        %v665 = vadd.f32 %v296, %v664
        %666 = vmatmul.f32.gmra.mxu0 %v459
        %v667 = vpop.f32.mrf.mxu0
        %v668 = vadd.f32 %v296, %v667
        %669 = vmatmul.f32.gmra.mxu0 %v462
        %v670 = vpop.f32.mrf.mxu0
        %v671 = vadd.f32 %v296, %v670
        %672 = vmatmul.f32.gmra.mxu0 %v465
        %v673 = vpop.f32.mrf.mxu0
        %v674 = vadd.f32 %v296, %v673
        %675 = vmatmul.f32.gmra.mxu0 %v468
        %v676 = vpop.f32.mrf.mxu0
        %v677 = vadd.f32 %v296, %v676
        %678 = vmatmul.f32.gmra.mxu0 %v471
        %v679 = vpop.f32.mrf.mxu0
        %v680 = vadd.f32 %v296, %v679
        %681 = vmatmul.f32.gmra.mxu0 %v474
        %v682 = vpop.f32.mrf.mxu0
        %v683 = vadd.f32 %v296, %v682
        %684 = vmatmul.f32.gmra.mxu0 %v477
        %v685 = vpop.f32.mrf.mxu0
        %v686 = vadd.f32 %v296, %v685
        %687 = vmatmul.f32.gmra.mxu0 %v480
        %v688 = vpop.f32.mrf.mxu0
        %v689 = vadd.f32 %v296, %v688
        %690 = vmatmul.f32.gmra.mxu0 %v483
        %v691 = vpop.f32.mrf.mxu0
        %v692 = vadd.f32 %v296, %v691
        %693 = vmatmul.f32.gmra.mxu0 %v486
        %v694 = vpop.f32.mrf.mxu0
        %v695 = vadd.f32 %v296, %v694
        %696 = vmatmul.f32.gmra.mxu0 %v489
        %v697 = vpop.f32.mrf.mxu0
        %v698 = vadd.f32 %v296, %v697
        %699 = vdwg.mxu0
        %700 = vst [vmem:[%s202] sm:$0xff] %v509
        %701 = vst [vmem:[%s202 + $0x8] sm:$0xff] %v512
        %702 = vst [vmem:[%s202 + $0x10] sm:$0xff] %v515
        %703 = vst [vmem:[%s202 + $0x18] sm:$0xff] %v518
        %704 = vst [vmem:[%s202 + $0x20] sm:$0xff] %v521
        %705 = vst [vmem:[%s202 + $0x28] sm:$0xff] %v524
        %706 = vst [vmem:[%s202 + $0x30] sm:$0xff] %v527
        %707 = vst [vmem:[%s202 + $0x38] sm:$0xff] %v530
        %708 = vst [vmem:[%s202 + $0x40] sm:$0xff] %v533
        %709 = vst [vmem:[%s202 + $0x48] sm:$0xff] %v536
        %710 = vst [vmem:[%s202 + $0x50] sm:$0xff] %v539
        %711 = vst [vmem:[%s202 + $0x58] sm:$0xff] %v542
        %712 = vst [vmem:[%s202 + $0x60] sm:$0xff] %v545
        %713 = vst [vmem:[%s202 + $0x68] sm:$0xff] %v548
        %714 = vst [vmem:[%s202 + $0x70] sm:$0xff] %v551
        %715 = vst [vmem:[%s202 + $0x78] sm:$0xff] %v554
        %716 = vst [vmem:[%s202 + $0x80] sm:$0xff] %v557
        %717 = vst [vmem:[%s202 + $0x88] sm:$0xff] %v560
        %718 = vst [vmem:[%s202 + $0x90] sm:$0xff] %v563
        %719 = vst [vmem:[%s202 + $0x98] sm:$0xff] %v566
        %720 = vst [vmem:[%s202 + $0xa0] sm:$0xff] %v569
        %721 = vst [vmem:[%s202 + $0xa8] sm:$0xff] %v572
        %722 = vst [vmem:[%s202 + $0xb0] sm:$0xff] %v575
        %723 = vst [vmem:[%s202 + $0xb8] sm:$0xff] %v578
        %724 = vst [vmem:[%s202 + $0xc0] sm:$0xff] %v581
        %725 = vst [vmem:[%s202 + $0xc8] sm:$0xff] %v584
        %726 = vst [vmem:[%s202 + $0xd0] sm:$0xff] %v587
        %727 = vst [vmem:[%s202 + $0xd8] sm:$0xff] %v590
        %728 = vst [vmem:[%s202 + $0xe0] sm:$0xff] %v593
        %729 = vst [vmem:[%s202 + $0xe8] sm:$0xff] %v596
        %730 = vst [vmem:[%s202 + $0xf0] sm:$0xff] %v599
        %731 = vst [vmem:[%s202 + $0xf8] sm:$0xff] %v602
        %732 = vst [vmem:[%s202 + $0x100] sm:$0xff] %v605
        %733 = vst [vmem:[%s202 + $0x108] sm:$0xff] %v608
        %734 = vst [vmem:[%s202 + $0x110] sm:$0xff] %v611
        %735 = vst [vmem:[%s202 + $0x118] sm:$0xff] %v614
        %736 = vst [vmem:[%s202 + $0x120] sm:$0xff] %v617
        %737 = vst [vmem:[%s202 + $0x128] sm:$0xff] %v620
        %738 = vst [vmem:[%s202 + $0x130] sm:$0xff] %v623
        %739 = vst [vmem:[%s202 + $0x138] sm:$0xff] %v626
        %740 = vst [vmem:[%s202 + $0x140] sm:$0xff] %v629
        %741 = vst [vmem:[%s202 + $0x148] sm:$0xff] %v632
        %742 = vst [vmem:[%s202 + $0x150] sm:$0xff] %v635
        %743 = vst [vmem:[%s202 + $0x158] sm:$0xff] %v638
        %744 = vst [vmem:[%s202 + $0x160] sm:$0xff] %v641
        %745 = vst [vmem:[%s202 + $0x168] sm:$0xff] %v644
        %746 = vst [vmem:[%s202 + $0x170] sm:$0xff] %v647
        %747 = vst [vmem:[%s202 + $0x178] sm:$0xff] %v650
        %748 = vst [vmem:[%s202 + $0x180] sm:$0xff] %v653
        %749 = vst [vmem:[%s202 + $0x188] sm:$0xff] %v656
        %750 = vst [vmem:[%s202 + $0x190] sm:$0xff] %v659
        %751 = vst [vmem:[%s202 + $0x198] sm:$0xff] %v662
        %752 = vst [vmem:[%s202 + $0x1a0] sm:$0xff] %v665
        %753 = vst [vmem:[%s202 + $0x1a8] sm:$0xff] %v668
        %754 = vst [vmem:[%s202 + $0x1b0] sm:$0xff] %v671
        %755 = vst [vmem:[%s202 + $0x1b8] sm:$0xff] %v674
        %756 = vst [vmem:[%s202 + $0x1c0] sm:$0xff] %v677
        %757 = vst [vmem:[%s202 + $0x1c8] sm:$0xff] %v680
        %758 = vst [vmem:[%s202 + $0x1d0] sm:$0xff] %v683
        %759 = vst [vmem:[%s202 + $0x1d8] sm:$0xff] %v686
        %760 = vst [vmem:[%s202 + $0x1e0] sm:$0xff] %v689
        %761 = vst [vmem:[%s202 + $0x1e8] sm:$0xff] %v692
        %762 = vst [vmem:[%s202 + $0x1f0] sm:$0xff] %v695
        %763 = vst [vmem:[%s202 + $0x1f8] sm:$0xff] %v698
        %s764 = sand.u32 %s109, 1
        %s765 = scalar_lea.sflag [#allocation5], %s764
        %s766 = sand.u32 %s109, 1
        %s767 = smul.addr %s766, 512
        %s768 = scalar_lea.vmem [#allocation4], %s767
        // Predicated region
        $region33: #{_project.1} parent=31 // pred_check
          %p769 = pneg %p119
        $region34: #{_project.1} parent=31 // pred_check_branch
          %771 = sbr.rel (%p769) target = $region36
        $region35: #{_project.1} parent=31 // pred_region
          %s772 = smul.u32 64, %s19
          %774 = vsyncadd %s765, 0
          %s775 = smul.addr %s772, 8
          %s776 = scalar_lea.hbm %s4, %s775
          %s777 = sshll.u32 %s768, 4
          %s778 = int_to_ptr.vmem [resolvable:$true] %s777
          %s779 = sshll.u32 %s776, 4
          %s780 = int_to_ptr.hbm [resolvable:$true] %s779
          %785 = dma.vmem_to_hbm [thread:$0]  %s778, 8192, %s780, %s765, 128, 128, 8
        $region36: #{_project.1} parent=31 // pred_fallthru
          _
      $region32: #{_project.1} parent=5 // pred_fallthru
        _
      %p786 = scmp.le.s32.totalorder 2, %s14
      // Predicated region
      $region37: #{_project.1} parent=5 // pred_check
        %p787 = pneg %p786
      $region38: #{_project.1} parent=5 // pred_check_branch
        %789 = sbr.rel (%p787) target = $region40
      $region39: #{_project.1} parent=5 // pred_region
        %s790 = ssub.s32 %s14, 2
        // Predicated region
        $region41: #{_project.1} parent=39 // pred_check
          %p791 = pneg %p125
        $region42: #{_project.1} parent=39 // pred_check_branch
          %793 = sbr.rel (%p791) target = $region44
        $region43: #{_project.1} parent=39 // pred_region
          %s794 = sand.u32 %s110, 1
          %s795 = scalar_lea.sflag [#allocation5], %s794
          %s796 = sand.u32 %s110, 1
          %s797 = smul.addr %s796, 512
          %s798 = scalar_lea.vmem [#allocation4], %s797
          %800 = dma.done %s795, 8192
        $region44: #{_project.1} parent=39 // pred_fallthru
          _
      $region40: #{_project.1} parent=5 // pred_fallthru
        _
    $region6: #{_project.1} parent=1 // loop_footer
      %s18 = sadd.s32 1, %s14
    $region7: #{_project.1} parent=1 // loop_footer_branch
      %13 = sbr.rel target = $region3
    $region8: #{_project.1} parent=1 // loop_exit
      _
    %801 = vsyncpa [#allocation5], 1
    %s802 = scalar_lea.sflag [#allocation5], 1
    %803 = vsyncpa %s802, 1

</llo_original>
